<compile_context>
chip_gen: v7x
topology: tpu7x:2x2x1
jax: 0.10.0
libtpu: 0.0.40
codegen_flags: <defaults>
</compile_context>

<pallas_src>
import math

import numpy as np
import jax
import jax.numpy as jnp
from jax import lax
from jax.experimental import pallas as pl
from jax.experimental.pallas import tpu as pltpu

KERNLEN = 21
PAD = 10


# ----------------------------------------------------------------------------
# Filter construction (exact separable factorization of the PyTorch gauss_kernel)
# ----------------------------------------------------------------------------
def _gauss_1d(kernlen=KERNLEN, nsig=3):
    """1-D factor u such that outer(u, u) == the normalized PyTorch gauss_kernel."""
    interval = (2 * nsig + 1.0) / kernlen
    x = np.linspace(-nsig - interval / 2.0, nsig + interval / 2.0, kernlen + 1)
    cdf = np.array([0.5 * (1.0 + math.erf(v / math.sqrt(2.0))) for v in x],
                   dtype=np.float64)
    kern1d = np.diff(cdf)                     # > 0
    u = np.sqrt(kern1d)
    u = u / u.sum()                           # outer(u, u) sums to 1
    return u.astype(np.float32)               # (21,)


def gauss_kernel_2d(kernlen=KERNLEN, nsig=3):
    """Same construction as the PyTorch gauss_kernel (used by the reference only)."""
    interval = (2 * nsig + 1.0) / kernlen
    x = np.linspace(-nsig - interval / 2.0, nsig + interval / 2.0, kernlen + 1)
    cdf = np.array([0.5 * (1.0 + math.erf(v / math.sqrt(2.0))) for v in x],
                   dtype=np.float64)
    kern1d = np.diff(cdf)
    kernel_raw = np.sqrt(np.outer(kern1d, kern1d))
    kernel = kernel_raw / kernel_raw.sum()
    return kernel.astype(np.float32)


def _row_band(u, size, pad=PAD):
    """Band matrix M (size,size): (M @ x)[h] = sum_i u[i] * x[h+i-pad], zero-padded."""
    K = u.shape[0]
    M = np.zeros((size, size), np.float32)
    for h in range(size):
        for i in range(K):
            r = h + i - pad
            if 0 <= r < size:
                M[h, r] = u[i]
    return M


# ----------------------------------------------------------------------------
# VMEM budgeting (generation aware)
# ----------------------------------------------------------------------------
def _vmem_physical_bytes():
    """Per-TensorCore VMEM; conservative fallback is v7x's 64 MiB."""
    try:
        info = pltpu.get_tpu_info()
        for attr in ("vmem_capacity_bytes", "vmem_bytes", "vmem_size_bytes"):
            v = getattr(info, attr, None)
            if v:
                return int(v)
    except Exception:
        pass
    return 64 << 20


def _est_vmem_bytes(P, H, W):
    """Working-set estimate for one grid step (f32)."""
    f32 = 4
    inputs = 2 * 2 * P * H * W * f32       # x1, x2 blocks, double-buffered pipeline
    consts = 2 * (H * H + W * W) * f32     # Rb, Cb (constant index maps, still 2x)
    work = 8 * H * W * f32                 # per-plane d / t / b intermediates + slack
    return inputs + consts + work + (2 << 20)


def _pick_planes(B, H, W, budget_bytes, max_unroll=32):
    """Largest divisor of B (bounded unroll) whose working set fits the budget."""
    best = None
    for P in range(1, min(B, max_unroll) + 1):
        if B % P != 0:
            continue
        if _est_vmem_bytes(P, H, W) <= budget_bytes:
            best = P
    if best is None:
        raise ValueError(
            "ColorLoss Pallas kernel: a single (%d, %d) plane exceeds the VMEM budget "
            "(%d bytes); this size needs the row/col halo tiling (see TODO)."
            % (H, W, budget_bytes))
    return best


# ----------------------------------------------------------------------------
# Kernel
# ----------------------------------------------------------------------------
def _color_loss_kernel(rb_ref, cb_ref, x1_ref, x2_ref, out_ref):
    """One batch of P planes per grid step.

    rb_ref:  (H, H)      row-pass band matrix (shared by all planes)
    cb_ref:  (W, W)      column-pass band matrix (shared by all planes)
    x1_ref:  (P, H, W)   P planes of x1
    x2_ref:  (P, H, W)   P planes of x2
    out_ref: (8, 128)    per-step partial sum broadcast over one vreg (lane-dense)
    """
    rb = rb_ref[...]
    cb = cb_ref[...]
    P = x1_ref.shape[0]

    acc = jnp.zeros((1, 1), jnp.float32)
    for p in range(P):                                   # static unroll, 2-D MXU matmuls
        # Diff in VMEM (linearity: blur(x1) - blur(x2) == blur(x1 - x2)).
        d_p = x1_ref[p].astype(jnp.float32) - x2_ref[p].astype(jnp.float32)   # (H, W)
        # Row pass (MXU): t[h, w] = sum_r Rb[h, r] * d[r, w]
        t = jnp.dot(rb, d_p, preferred_element_type=jnp.float32)              # (H, W)
        # Column pass (MXU): b[h, w] = sum_c t[h, c] * Cb[c, w]
        b = jnp.dot(t, cb, preferred_element_type=jnp.float32)                # (H, W)
        acc = acc + jnp.sum(b * b, keepdims=True)                             # (1, 1)

    out_ref[...] = jnp.broadcast_to(acc, (8, 128))


# ----------------------------------------------------------------------------
# Wrapper
# ----------------------------------------------------------------------------
def color_loss(x1, x2):
    """Pallas implementation of ColorLoss.forward(x1, x2). Inputs are NCHW."""
    N, C, H, W = x1.shape
    assert x2.shape == x1.shape
    assert C == 3, "ColorLoss uses Blur(3): inputs must have 3 channels"
    B = N * C

    # Separable band matrices (exact factorization of the 21x21 filter).
    u = _gauss_1d()
    rb_j = jnp.asarray(_row_band(u, H))          # (H, H)  left-multiply (row pass)
    cb_j = jnp.asarray(_row_band(u, W).T)        # (W, W)  right-multiply (column pass)

    # Plane views: metadata-only reshape, no HBM copy. Diff is computed in-kernel.
    x1p = x1.reshape(B, H, W)
    x2p = x2.reshape(B, H, W)

    # Generation-aware VMEM budget and plane batching.
    phys = _vmem_physical_bytes()
    budget = min(int(phys * 0.75), 96 << 20)     # ~48 MiB on v7x, ~96 MiB on v5e/v6e
    P = _pick_planes(B, H, W, budget)
    G = B // P
    est = _est_vmem_bytes(P, H, W)
    vmem_limit = int(min(max(est, 16 << 20), phys))
    assert est <= vmem_limit, (est, vmem_limit)  # fail loudly rather than clamp

    out = pl.pallas_call(
        _color_loss_kernel,
        out_shape=jax.ShapeDtypeStruct((G, 8, 128), jnp.float32),
        grid_spec=pltpu.PrefetchScalarGridSpec(
            num_scalar_prefetch=0,
            grid=(G,),
            in_specs=[
                pl.BlockSpec((H, H), lambda g: (0, 0)),      # Rb (constant)
                pl.BlockSpec((W, W), lambda g: (0, 0)),      # Cb (constant)
                pl.BlockSpec((P, H, W), lambda g: (g, 0, 0)),  # x1 planes
                pl.BlockSpec((P, H, W), lambda g: (g, 0, 0)),  # x2 planes
            ],
            out_specs=pl.BlockSpec((None, 8, 128), lambda g: (g, 0, 0)),
        ),
        compiler_params=pltpu.CompilerParams(
            dimension_semantics=("parallel",),               # independent per-step partials
            vmem_limit_bytes=vmem_limit),
    )(rb_j, cb_j, x1p, x2p)

    partials = out[:, 0, 0]                                  # one partial sum per grid step
    return jnp.sum(partials) / (2.0 * N)


# ----------------------------------------------------------------------------
# Pure-JAX reference (depthwise 21x21 conv, matching the PyTorch module)
# ----------------------------------------------------------------------------
def _color_loss_ref(x1, x2):
    N, C, H, W = x1.shape
    w2d = jnp.asarray(gauss_kernel_2d(KERNLEN, 3))
    wk = jnp.broadcast_to(w2d[None, None], (C, 1, KERNLEN, KERNLEN))
    conv = lambda x: lax.conv_general_dilated(
        x.astype(jnp.float32), wk, window_strides=(1, 1),
        padding=[(PAD, PAD), (PAD, PAD)],
        dimension_numbers=("NCHW", "OIHW", "NCHW"), feature_group_count=C,
        precision=lax.Precision.HIGHEST)
    d = conv(x1) - conv(x2)
    return jnp.sum(d * d) / (2.0 * N)


if __name__ == "__main__":
    key = jax.random.PRNGKey(0)
    k1, k2 = jax.random.split(key)
    N, C, H, W = 2, 3, 16, 16
    x1 = jax.random.normal(k1, (N, C, H, W), dtype=jnp.float32)
    x2 = jax.random.normal(k2, (N, C, H, W), dtype=jnp.float32)

    loss = jax.block_until_ready(color_loss(x1, x2))
    ref = jax.block_until_ready(_color_loss_ref(x1, x2))

    assert np.allclose(np.asarray(loss), np.asarray(ref), rtol=2e-3, atol=2e-4), (
        loss, ref)
    print("KERNEL_OK")
</pallas_src>

<mosaic_0001>
module attributes {stable_mosaic.version = 11 : i64} {
  func.func @_color_loss_kernel(%arg0: i32, %arg1: memref<16x16xf32, #tpu.memory_space<vmem>>, %arg2: memref<16x16xf32, #tpu.memory_space<vmem>>, %arg3: memref<6x16x16xf32, #tpu.memory_space<vmem>>, %arg4: memref<6x16x16xf32, #tpu.memory_space<vmem>>, %arg5: memref<1x8x128xf32, #tpu.memory_space<vmem>>) attributes {dimension_semantics = [#tpu.dimension_semantics<parallel>], iteration_bounds = array<i64: 1>, scalar_prefetch = 0 : i64, scratch_operands = 0 : i64, tpu.core_type = #tpu.core_type<tc>, window_params = [{pipeline_mode = #tpu.pipeline_mode<synchronous>, transform_indices = @transform_0, window_bounds = array<i64: 16, 16>}, {pipeline_mode = #tpu.pipeline_mode<synchronous>, transform_indices = @transform_1, window_bounds = array<i64: 16, 16>}, {transform_indices = @transform_2, window_bounds = array<i64: 6, 16, 16>}, {transform_indices = @transform_3, window_bounds = array<i64: 6, 16, 16>}, {transform_indices = @transform_4, window_bounds = array<i64: 1, 8, 128>}]} {
    %c0 = arith.constant 0 : index
    %c0_0 = arith.constant 0 : index
    %0 = vector.load %arg1[%c0, %c0_0] : memref<16x16xf32, #tpu.memory_space<vmem>>, vector<16x16xf32>
    %c0_1 = arith.constant 0 : index
    %c0_2 = arith.constant 0 : index
    %1 = vector.load %arg2[%c0_1, %c0_2] : memref<16x16xf32, #tpu.memory_space<vmem>>, vector<16x16xf32>
    %cst = arith.constant 0.000000e+00 : f32
    %2 = vector.broadcast %cst : f32 to vector<1x1xf32>
    %c0_3 = arith.constant 0 : index
    %c0_4 = arith.constant 0 : index
    %c0_5 = arith.constant 0 : index
    %3 = vector.load %arg3[%c0_3, %c0_4, %c0_5] : memref<6x16x16xf32, #tpu.memory_space<vmem>>, vector<1x16x16xf32>
    %4 = vector.shape_cast %3 : vector<1x16x16xf32> to vector<16x16xf32>
    %c0_6 = arith.constant 0 : index
    %c0_7 = arith.constant 0 : index
    %c0_8 = arith.constant 0 : index
    %5 = vector.load %arg4[%c0_6, %c0_7, %c0_8] : memref<6x16x16xf32, #tpu.memory_space<vmem>>, vector<1x16x16xf32>
    %6 = vector.shape_cast %5 : vector<1x16x16xf32> to vector<16x16xf32>
    %7 = arith.subf %4, %6 : vector<16x16xf32>
    %cst_9 = arith.constant dense<0.000000e+00> : vector<16x16xf32>
    %8 = tpu.matmul %0, %7, %cst_9 {dimension_numbers = #tpu.dot_dimension_numbers<[1], [0], [0], [1], [0, 0, 1, 1], [], []>} : vector<16x16xf32>, vector<16x16xf32>, vector<16x16xf32> -> vector<16x16xf32>
    %cst_10 = arith.constant dense<0.000000e+00> : vector<16x16xf32>
    %9 = tpu.matmul %8, %1, %cst_10 {dimension_numbers = #tpu.dot_dimension_numbers<[1], [0], [0], [1], [0, 0, 1, 1], [], []>} : vector<16x16xf32>, vector<16x16xf32>, vector<16x16xf32> -> vector<16x16xf32>
    %10 = arith.mulf %9, %9 : vector<16x16xf32>
    %11 = vector.shape_cast %10 : vector<16x16xf32> to vector<1x16x16xf32>
    %cst_11 = arith.constant dense<0.000000e+00> : vector<1xf32>
    %12 = vector.multi_reduction <add>, %11, %cst_11 [1, 2] : vector<1x16x16xf32> to vector<1xf32>
    %13 = vector.shape_cast %12 : vector<1xf32> to vector<1x1x1xf32>
    %14 = vector.extract %13[0, 0, 0] : f32 from vector<1x1x1xf32>
    %15 = vector.broadcast %14 : f32 to vector<1x1xf32>
    %16 = arith.addf %2, %15 : vector<1x1xf32>
    %c1 = arith.constant 1 : index
    %c0_12 = arith.constant 0 : index
    %c0_13 = arith.constant 0 : index
    %17 = vector.load %arg3[%c1, %c0_12, %c0_13] : memref<6x16x16xf32, #tpu.memory_space<vmem>>, vector<1x16x16xf32>
    %18 = vector.shape_cast %17 : vector<1x16x16xf32> to vector<16x16xf32>
    %c1_14 = arith.constant 1 : index
    %c0_15 = arith.constant 0 : index
    %c0_16 = arith.constant 0 : index
    %19 = vector.load %arg4[%c1_14, %c0_15, %c0_16] : memref<6x16x16xf32, #tpu.memory_space<vmem>>, vector<1x16x16xf32>
    %20 = vector.shape_cast %19 : vector<1x16x16xf32> to vector<16x16xf32>
    %21 = arith.subf %18, %20 : vector<16x16xf32>
    %cst_17 = arith.constant dense<0.000000e+00> : vector<16x16xf32>
    %22 = tpu.matmul %0, %21, %cst_17 {dimension_numbers = #tpu.dot_dimension_numbers<[1], [0], [0], [1], [0, 0, 1, 1], [], []>} : vector<16x16xf32>, vector<16x16xf32>, vector<16x16xf32> -> vector<16x16xf32>
    %cst_18 = arith.constant dense<0.000000e+00> : vector<16x16xf32>
    %23 = tpu.matmul %22, %1, %cst_18 {dimension_numbers = #tpu.dot_dimension_numbers<[1], [0], [0], [1], [0, 0, 1, 1], [], []>} : vector<16x16xf32>, vector<16x16xf32>, vector<16x16xf32> -> vector<16x16xf32>
    %24 = arith.mulf %23, %23 : vector<16x16xf32>
    %25 = vector.shape_cast %24 : vector<16x16xf32> to vector<1x16x16xf32>
    %cst_19 = arith.constant dense<0.000000e+00> : vector<1xf32>
    %26 = vector.multi_reduction <add>, %25, %cst_19 [1, 2] : vector<1x16x16xf32> to vector<1xf32>
    %27 = vector.shape_cast %26 : vector<1xf32> to vector<1x1x1xf32>
    %28 = vector.extract %27[0, 0, 0] : f32 from vector<1x1x1xf32>
    %29 = vector.broadcast %28 : f32 to vector<1x1xf32>
    %30 = arith.addf %16, %29 : vector<1x1xf32>
    %c2 = arith.constant 2 : index
    %c0_20 = arith.constant 0 : index
    %c0_21 = arith.constant 0 : index
    %31 = vector.load %arg3[%c2, %c0_20, %c0_21] : memref<6x16x16xf32, #tpu.memory_space<vmem>>, vector<1x16x16xf32>
    %32 = vector.shape_cast %31 : vector<1x16x16xf32> to vector<16x16xf32>
    %c2_22 = arith.constant 2 : index
    %c0_23 = arith.constant 0 : index
    %c0_24 = arith.constant 0 : index
    %33 = vector.load %arg4[%c2_22, %c0_23, %c0_24] : memref<6x16x16xf32, #tpu.memory_space<vmem>>, vector<1x16x16xf32>
    %34 = vector.shape_cast %33 : vector<1x16x16xf32> to vector<16x16xf32>
    %35 = arith.subf %32, %34 : vector<16x16xf32>
    %cst_25 = arith.constant dense<0.000000e+00> : vector<16x16xf32>
    %36 = tpu.matmul %0, %35, %cst_25 {dimension_numbers = #tpu.dot_dimension_numbers<[1], [0], [0], [1], [0, 0, 1, 1], [], []>} : vector<16x16xf32>, vector<16x16xf32>, vector<16x16xf32> -> vector<16x16xf32>
    %cst_26 = arith.constant dense<0.000000e+00> : vector<16x16xf32>
    %37 = tpu.matmul %36, %1, %cst_26 {dimension_numbers = #tpu.dot_dimension_numbers<[1], [0], [0], [1], [0, 0, 1, 1], [], []>} : vector<16x16xf32>, vector<16x16xf32>, vector<16x16xf32> -> vector<16x16xf32>
    %38 = arith.mulf %37, %37 : vector<16x16xf32>
    %39 = vector.shape_cast %38 : vector<16x16xf32> to vector<1x16x16xf32>
    %cst_27 = arith.constant dense<0.000000e+00> : vector<1xf32>
    %40 = vector.multi_reduction <add>, %39, %cst_27 [1, 2] : vector<1x16x16xf32> to vector<1xf32>
    %41 = vector.shape_cast %40 : vector<1xf32> to vector<1x1x1xf32>
    %42 = vector.extract %41[0, 0, 0] : f32 from vector<1x1x1xf32>
    %43 = vector.broadcast %42 : f32 to vector<1x1xf32>
    %44 = arith.addf %30, %43 : vector<1x1xf32>
    %c3 = arith.constant 3 : index
    %c0_28 = arith.constant 0 : index
    %c0_29 = arith.constant 0 : index
    %45 = vector.load %arg3[%c3, %c0_28, %c0_29] : memref<6x16x16xf32, #tpu.memory_space<vmem>>, vector<1x16x16xf32>
    %46 = vector.shape_cast %45 : vector<1x16x16xf32> to vector<16x16xf32>
    %c3_30 = arith.constant 3 : index
    %c0_31 = arith.constant 0 : index
    %c0_32 = arith.constant 0 : index
    %47 = vector.load %arg4[%c3_30, %c0_31, %c0_32] : memref<6x16x16xf32, #tpu.memory_space<vmem>>, vector<1x16x16xf32>
    %48 = vector.shape_cast %47 : vector<1x16x16xf32> to vector<16x16xf32>
    %49 = arith.subf %46, %48 : vector<16x16xf32>
    %cst_33 = arith.constant dense<0.000000e+00> : vector<16x16xf32>
    %50 = tpu.matmul %0, %49, %cst_33 {dimension_numbers = #tpu.dot_dimension_numbers<[1], [0], [0], [1], [0, 0, 1, 1], [], []>} : vector<16x16xf32>, vector<16x16xf32>, vector<16x16xf32> -> vector<16x16xf32>
    %cst_34 = arith.constant dense<0.000000e+00> : vector<16x16xf32>
    %51 = tpu.matmul %50, %1, %cst_34 {dimension_numbers = #tpu.dot_dimension_numbers<[1], [0], [0], [1], [0, 0, 1, 1], [], []>} : vector<16x16xf32>, vector<16x16xf32>, vector<16x16xf32> -> vector<16x16xf32>
    %52 = arith.mulf %51, %51 : vector<16x16xf32>
    %53 = vector.shape_cast %52 : vector<16x16xf32> to vector<1x16x16xf32>
    %cst_35 = arith.constant dense<0.000000e+00> : vector<1xf32>
    %54 = vector.multi_reduction <add>, %53, %cst_35 [1, 2] : vector<1x16x16xf32> to vector<1xf32>
    %55 = vector.shape_cast %54 : vector<1xf32> to vector<1x1x1xf32>
    %56 = vector.extract %55[0, 0, 0] : f32 from vector<1x1x1xf32>
    %57 = vector.broadcast %56 : f32 to vector<1x1xf32>
    %58 = arith.addf %44, %57 : vector<1x1xf32>
    %c4 = arith.constant 4 : index
    %c0_36 = arith.constant 0 : index
    %c0_37 = arith.constant 0 : index
    %59 = vector.load %arg3[%c4, %c0_36, %c0_37] : memref<6x16x16xf32, #tpu.memory_space<vmem>>, vector<1x16x16xf32>
    %60 = vector.shape_cast %59 : vector<1x16x16xf32> to vector<16x16xf32>
    %c4_38 = arith.constant 4 : index
    %c0_39 = arith.constant 0 : index
    %c0_40 = arith.constant 0 : index
    %61 = vector.load %arg4[%c4_38, %c0_39, %c0_40] : memref<6x16x16xf32, #tpu.memory_space<vmem>>, vector<1x16x16xf32>
    %62 = vector.shape_cast %61 : vector<1x16x16xf32> to vector<16x16xf32>
    %63 = arith.subf %60, %62 : vector<16x16xf32>
    %cst_41 = arith.constant dense<0.000000e+00> : vector<16x16xf32>
    %64 = tpu.matmul %0, %63, %cst_41 {dimension_numbers = #tpu.dot_dimension_numbers<[1], [0], [0], [1], [0, 0, 1, 1], [], []>} : vector<16x16xf32>, vector<16x16xf32>, vector<16x16xf32> -> vector<16x16xf32>
    %cst_42 = arith.constant dense<0.000000e+00> : vector<16x16xf32>
    %65 = tpu.matmul %64, %1, %cst_42 {dimension_numbers = #tpu.dot_dimension_numbers<[1], [0], [0], [1], [0, 0, 1, 1], [], []>} : vector<16x16xf32>, vector<16x16xf32>, vector<16x16xf32> -> vector<16x16xf32>
    %66 = arith.mulf %65, %65 : vector<16x16xf32>
    %67 = vector.shape_cast %66 : vector<16x16xf32> to vector<1x16x16xf32>
    %cst_43 = arith.constant dense<0.000000e+00> : vector<1xf32>
    %68 = vector.multi_reduction <add>, %67, %cst_43 [1, 2] : vector<1x16x16xf32> to vector<1xf32>
    %69 = vector.shape_cast %68 : vector<1xf32> to vector<1x1x1xf32>
    %70 = vector.extract %69[0, 0, 0] : f32 from vector<1x1x1xf32>
    %71 = vector.broadcast %70 : f32 to vector<1x1xf32>
    %72 = arith.addf %58, %71 : vector<1x1xf32>
    %c5 = arith.constant 5 : index
    %c0_44 = arith.constant 0 : index
    %c0_45 = arith.constant 0 : index
    %73 = vector.load %arg3[%c5, %c0_44, %c0_45] : memref<6x16x16xf32, #tpu.memory_space<vmem>>, vector<1x16x16xf32>
    %74 = vector.shape_cast %73 : vector<1x16x16xf32> to vector<16x16xf32>
    %c5_46 = arith.constant 5 : index
    %c0_47 = arith.constant 0 : index
    %c0_48 = arith.constant 0 : index
    %75 = vector.load %arg4[%c5_46, %c0_47, %c0_48] : memref<6x16x16xf32, #tpu.memory_space<vmem>>, vector<1x16x16xf32>
    %76 = vector.shape_cast %75 : vector<1x16x16xf32> to vector<16x16xf32>
    %77 = arith.subf %74, %76 : vector<16x16xf32>
    %cst_49 = arith.constant dense<0.000000e+00> : vector<16x16xf32>
    %78 = tpu.matmul %0, %77, %cst_49 {dimension_numbers = #tpu.dot_dimension_numbers<[1], [0], [0], [1], [0, 0, 1, 1], [], []>} : vector<16x16xf32>, vector<16x16xf32>, vector<16x16xf32> -> vector<16x16xf32>
    %cst_50 = arith.constant dense<0.000000e+00> : vector<16x16xf32>
    %79 = tpu.matmul %78, %1, %cst_50 {dimension_numbers = #tpu.dot_dimension_numbers<[1], [0], [0], [1], [0, 0, 1, 1], [], []>} : vector<16x16xf32>, vector<16x16xf32>, vector<16x16xf32> -> vector<16x16xf32>
    %80 = arith.mulf %79, %79 : vector<16x16xf32>
    %81 = vector.shape_cast %80 : vector<16x16xf32> to vector<1x16x16xf32>
    %cst_51 = arith.constant dense<0.000000e+00> : vector<1xf32>
    %82 = vector.multi_reduction <add>, %81, %cst_51 [1, 2] : vector<1x16x16xf32> to vector<1xf32>
    %83 = vector.shape_cast %82 : vector<1xf32> to vector<1x1x1xf32>
    %84 = vector.extract %83[0, 0, 0] : f32 from vector<1x1x1xf32>
    %85 = vector.broadcast %84 : f32 to vector<1x1xf32>
    %86 = arith.addf %72, %85 : vector<1x1xf32>
    %87 = vector.shape_cast %86 : vector<1x1xf32> to vector<1x1xf32>
    %88 = vector.broadcast %87 : vector<1x1xf32> to vector<8x128xf32>
    %c0_52 = arith.constant 0 : index
    %c0_53 = arith.constant 0 : index
    %c0_54 = arith.constant 0 : index
    %89 = vector.load %arg5[%c0_52, %c0_53, %c0_54] : memref<1x8x128xf32, #tpu.memory_space<vmem>>, vector<1x8x128xf32>
    %90 = vector.shape_cast %89 : vector<1x8x128xf32> to vector<8x128xf32>
    %91 = vector.shape_cast %88 : vector<8x128xf32> to vector<1x8x128xf32>
    tpu.vector_store %arg5[%c0_52, %c0_53, %c0_54], %91 {strides = array<i32>} : memref<1x8x128xf32, #tpu.memory_space<vmem>>, vector<1x8x128xf32>,
    return
  }
  func.func @transform_0(%arg0: i32) -> (i32, i32) {
    %c0_i32 = arith.constant 0 : i32
    %c0_i32_0 = arith.constant 0 : i32
    %c0_i32_1 = arith.constant 0 : i32
    return %c0_i32, %c0_i32_0 : i32, i32
  }
  func.func @transform_1(%arg0: i32) -> (i32, i32) {
    %c0_i32 = arith.constant 0 : i32
    %c0_i32_0 = arith.constant 0 : i32
    %c0_i32_1 = arith.constant 0 : i32
    return %c0_i32, %c0_i32_0 : i32, i32
  }
  func.func @transform_2(%arg0: i32) -> (i32, i32, i32) {
    %c0_i32 = arith.constant 0 : i32
    %c0_i32_0 = arith.constant 0 : i32
    %c0_i32_1 = arith.constant 0 : i32
    return %arg0, %c0_i32, %c0_i32_0 : i32, i32, i32
  }
  func.func @transform_3(%arg0: i32) -> (i32, i32, i32) {
    %c0_i32 = arith.constant 0 : i32
    %c0_i32_0 = arith.constant 0 : i32
    %c0_i32_1 = arith.constant 0 : i32
    return %arg0, %c0_i32, %c0_i32_0 : i32, i32, i32
  }
  func.func @transform_4(%arg0: i32) -> (i32, i32, i32) {
    %c0_i32 = arith.constant 0 : i32
    %c0_i32_0 = arith.constant 0 : i32
    %c0_i32_1 = arith.constant 0 : i32
    return %arg0, %c0_i32, %c0_i32_0 : i32, i32, i32
  }
}

</mosaic_0001>

<llo_original>
// kernel: tpu_custom_call.1
$region0: #{tpu_custom_call.1}
  #allocation0 [shape = 'u32[]', space=smem, size = 0x4, offset = 0x4, fixed_abs, tag = 'smem constant byte address 0x4 - core index']
  #allocation1 [shape = 'u32[144,128]{1,0:T(1,128)}', space=vmem, size = 0x12000, scoped, tag = 'internal scratch']
  %s0 = inlined_call_operand.hbm [shape: f32[16,16], index: 0, kind: input, shape index: {}]
  %s1 = inlined_call_operand.hbm [shape: f32[16,16], index: 1, kind: input, shape index: {}]
  %s2 = inlined_call_operand.hbm [shape: f32[6,16,16], index: 2, kind: input, shape index: {}]
  %s3 = inlined_call_operand.hbm [shape: f32[6,16,16], index: 3, kind: input, shape index: {}]
  %s4 = inlined_call_operand.hbm [shape: f32[1,8,128], index: 4, kind: output, shape index: {}]
  %s5 = sld [smem:[#allocation0]]
  $region42: #{tpu_custom_call.1} parent=0
    _
  %s7 = ssub.s32 1, %s5
  %s8 = scalar_select 0, %s7, %s5
  $region1: #{tpu_custom_call.1} parent=0
    #allocation2 [shape = 'u8[8192]{0}', space=vmem, size = 0x2000, scoped, tag = 'input window, operand 0, single buffered']
    #allocation3 [shape = 's32[1]{0}', space=sflag, size = 0x4, scoped, tag = 'scoped memory for tpu_custom_call.1']
    #allocation4 [shape = 's32[1]{0}', space=sflag, size = 0x4, scoped, tag = 'scoped memory for tpu_custom_call.1']
    #allocation5 [shape = 'u8[8192]{0}', space=vmem, size = 0x2000, scoped, tag = 'input window, operand 1, single buffered']
    #allocation6 [shape = 's32[1]{0}', space=sflag, size = 0x4, scoped, tag = 'scoped memory for tpu_custom_call.1']
    #allocation7 [shape = 'u8[49152]{0}', space=vmem, size = 0xc000, scoped, tag = 'input window, operand 2, single buffered']
    #allocation8 [shape = 'u8[49152]{0}', space=vmem, size = 0xc000, scoped, tag = 'input window, operand 3, single buffered']
    #allocation9 [shape = 's32[1]{0}', space=sflag, size = 0x4, scoped, tag = 'scoped memory for tpu_custom_call.1']
    #allocation10 [shape = 'u8[4096]{0}', space=vmem, size = 0x1000, scoped, tag = 'output window, operand 0, single buffered']
    %9 = vsyncpa [#allocation3], 0
    %10 = vsyncpa [#allocation6], 0
    %11 = vsyncpa [#allocation9], 0
    %12 = vsyncpa [#allocation4], 0
    // Predicated region
    $region2: #{tpu_custom_call.1} parent=1 // pred_check
      _
    $region3: #{tpu_custom_call.1} parent=1 // pred_check_branch
      %14 = sbr.rel (0) target = $region5
    $region4: #{tpu_custom_call.1} parent=1 // pred_region
      %s16 = ssub.s32 256, 256
      %17 = vsyncadd [#allocation3], %s16
      %s18 = sshll.u32 [#allocation2], 4
      %s19 = int_to_ptr.vmem [resolvable:$true] %s18
      %24 = dma.hbm_to_vmem [thread:$0]  %s0, 256, %s19, [#allocation3], 128, 128, 8
    $region5: #{tpu_custom_call.1} parent=1 // pred_fallthru
      _
    // Predicated region
    $region6: #{tpu_custom_call.1} parent=1 // pred_check
      _
    $region7: #{tpu_custom_call.1} parent=1 // pred_check_branch
      %26 = sbr.rel (0) target = $region9
    $region8: #{tpu_custom_call.1} parent=1 // pred_region
      %s28 = ssub.s32 256, 256
      %29 = vsyncadd [#allocation6], %s28
      %s30 = sshll.u32 [#allocation5], 4
      %s31 = int_to_ptr.vmem [resolvable:$true] %s30
      %36 = dma.hbm_to_vmem [thread:$0]  %s1, 256, %s31, [#allocation6], 128, 128, 8
    $region9: #{tpu_custom_call.1} parent=1 // pred_fallthru
      _
    // Predicated region
    $region10: #{tpu_custom_call.1} parent=1 // pred_check
      _
    $region11: #{tpu_custom_call.1} parent=1 // pred_check_branch
      %38 = sbr.rel (0) target = $region13
    $region12: #{tpu_custom_call.1} parent=1 // pred_region
      %s40 = ssub.s32 1536, 1536
      %41 = vsyncadd [#allocation6], %s40
      %s42 = sshll.u32 [#allocation7], 4
      %s43 = int_to_ptr.vmem [resolvable:$true] %s42
      %48 = dma.hbm_to_vmem [thread:$0]  %s2, 1536, %s43, [#allocation6], 128, 128, 8
    $region13: #{tpu_custom_call.1} parent=1 // pred_fallthru
      _
    // Predicated region
    $region14: #{tpu_custom_call.1} parent=1 // pred_check
      _
    $region15: #{tpu_custom_call.1} parent=1 // pred_check_branch
      %50 = sbr.rel (0) target = $region17
    $region16: #{tpu_custom_call.1} parent=1 // pred_region
      %s52 = ssub.s32 1536, 1536
      %53 = vsyncadd [#allocation9], %s52
      %s54 = sshll.u32 [#allocation8], 4
      %s55 = int_to_ptr.vmem [resolvable:$true] %s54
      %60 = dma.hbm_to_vmem [thread:$0]  %s3, 1536, %s55, [#allocation9], 128, 128, 8
    $region17: #{tpu_custom_call.1} parent=1 // pred_fallthru
      _
    // Predicated region
    $region18: #{tpu_custom_call.1} parent=1 // pred_check
      _
    $region19: #{tpu_custom_call.1} parent=1 // pred_check_branch
      %62 = sbr.rel (0) target = $region21
    $region20: #{tpu_custom_call.1} parent=1 // pred_region
      %63 = dma.done [#allocation3], 256
    $region21: #{tpu_custom_call.1} parent=1 // pred_fallthru
      _
    // Predicated region
    $region22: #{tpu_custom_call.1} parent=1 // pred_check
      _
    $region23: #{tpu_custom_call.1} parent=1 // pred_check_branch
      %65 = sbr.rel (0) target = $region25
    $region24: #{tpu_custom_call.1} parent=1 // pred_region
      %66 = dma.done [#allocation6], 256
    $region25: #{tpu_custom_call.1} parent=1 // pred_fallthru
      _
    // Predicated region
    $region26: #{tpu_custom_call.1} parent=1 // pred_check
      _
    $region27: #{tpu_custom_call.1} parent=1 // pred_check_branch
      %68 = sbr.rel (0) target = $region29
    $region28: #{tpu_custom_call.1} parent=1 // pred_region
      %69 = dma.done [#allocation6], 1536
    $region29: #{tpu_custom_call.1} parent=1 // pred_fallthru
      _
    // Predicated region
    $region30: #{tpu_custom_call.1} parent=1 // pred_check
      _
    $region31: #{tpu_custom_call.1} parent=1 // pred_check_branch
      %71 = sbr.rel (0) target = $region33
    $region32: #{tpu_custom_call.1} parent=1 // pred_region
      %72 = dma.done [#allocation9], 1536
    $region33: #{tpu_custom_call.1} parent=1 // pred_fallthru
      _
    %v73 = vld [vmem:[#allocation2] sm:$0xff]
    %v74 = vld [vmem:[#allocation2 + $0x8] sm:$0xff]
    %v75 = vld [vmem:[#allocation5] sm:$0xff]
    %v76 = vld [vmem:[#allocation5 + $0x8] sm:$0xff]
    %v77 = vld [vmem:[#allocation7] sm:$0xff]
    %v78 = vld [vmem:[#allocation7 + $0x8] sm:$0xff]
    %v79 = vld [vmem:[#allocation8] sm:$0xff]
    %v80 = vld [vmem:[#allocation8 + $0x8] sm:$0xff]
    %v81 = vsub.f32 %v77, %v79
    %v82 = vsub.f32 %v78, %v80
    %vm83 = vcmask 130048
    %v85 = vsel %vm83, %v73, 0
    %v88 = vsel %vm83, %v74, 0
    %90 = vmatprep.subr.mxu0 0.0
    %91 = vmatpush1.msra.mxu0 %v81
    %92 = vmatprep.subr.mxu0 0.0
    %93 = vmatpush1.msra.mxu0 %v82
    %94 = vmatprep.subr.mxu0 0.0
    %95 = vmatpush1.msra.mxu0 0.0
    %96 = vmatprep.subr.mxu0 0.0
    %97 = vmatpush1.msra.mxu0 0.0
    %98 = vmatprep.subr.mxu0 0.0
    %99 = vmatpush1.msra.mxu0 0.0
    %100 = vmatprep.subr.mxu0 0.0
    %101 = vmatpush1.msra.mxu0 0.0
    %102 = vmatprep.subr.mxu0 0.0
    %103 = vmatpush1.msra.mxu0 0.0
    %104 = vmatprep.subr.mxu0 0.0
    %105 = vmatpush1.msra.mxu0 0.0
    %106 = vmatprep.subr.mxu0 0.0
    %107 = vmatpush1.msra.mxu0 0.0
    %108 = vmatprep.subr.mxu0 0.0
    %109 = vmatpush1.msra.mxu0 0.0
    %110 = vmatprep.subr.mxu0 0.0
    %111 = vmatpush1.msra.mxu0 0.0
    %112 = vmatprep.subr.mxu0 0.0
    %113 = vmatpush1.msra.mxu0 0.0
    %114 = vmatprep.subr.mxu0 0.0
    %115 = vmatpush1.msra.mxu0 0.0
    %116 = vmatprep.subr.mxu0 0.0
    %117 = vmatpush1.msra.mxu0 0.0
    %118 = vmatprep.subr.mxu0 0.0
    %119 = vmatpush1.msra.mxu0 0.0
    %120 = vmatprep.subr.mxu0 0.0
    %121 = vmatpush1.msra.mxu0 0.0
    %122 = vmatprep.subr.mxu0 0.0
    %123 = vmatpush1.msra.mxu0 0.0
    %124 = vmatprep.subr.mxu0 0.0
    %125 = vmatpush1.msra.mxu0 0.0
    %126 = vmatprep.subr.mxu0 0.0
    %127 = vmatpush1.msra.mxu0 0.0
    %128 = vmatprep.subr.mxu0 0.0
    %129 = vmatpush1.msra.mxu0 0.0
    %130 = vmatprep.subr.mxu0 0.0
    %131 = vmatpush1.msra.mxu0 0.0
    %132 = vmatprep.subr.mxu0 0.0
    %133 = vmatpush1.msra.mxu0 0.0
    %134 = vmatprep.subr.mxu0 0.0
    %135 = vmatpush1.msra.mxu0 0.0
    %136 = vmatprep.subr.mxu0 0.0
    %137 = vmatpush1.msra.mxu0 0.0
    %138 = vmatprep.subr.mxu0 0.0
    %139 = vmatpush1.msra.mxu0 0.0
    %140 = vmatprep.subr.mxu0 0.0
    %141 = vmatpush1.msra.mxu0 0.0
    %142 = vmatprep.subr.mxu0 0.0
    %143 = vmatpush1.msra.mxu0 0.0
    %144 = vmatprep.subr.mxu0 0.0
    %145 = vmatpush1.msra.mxu0 0.0
    %146 = vmatprep.subr.mxu0 0.0
    %147 = vmatpush1.msra.mxu0 0.0
    %148 = vmatprep.subr.mxu0 0.0
    %149 = vmatpush1.msra.mxu0 0.0
    %150 = vmatprep.subr.mxu0 0.0
    %151 = vmatpush1.msra.mxu0 0.0
    %152 = vmatprep.subr.mxu0 0.0
    %153 = vmatpush1.msra.mxu0 0.0
    %154 = vmatprep.mubr.f32.mxu0 0.0
    %155 = vmatmul.mubr.f32.gmra.mrb[0].mxu0 %v85
    %v156 = vpop.f32.mrb[0].mxu0
    %v157 = vadd.f32 0.0, %v156
    %v158 = vpop.f32.mrb[0].mxu0
    %159 = vmatprep.mubr.f32.mxu0 0.0
    %160 = vmatmul.mubr.f32.gmra.mrb[0].mxu0 %v88
    %v161 = vpop.f32.mrb[0].mxu0
    %v162 = vadd.f32 0.0, %v161
    %v163 = vpop.f32.mrb[0].mxu0
    %164 = vdwg.mxu0
    %v166 = vsel %vm83, %v157, 0
    %v169 = vsel %vm83, %v162, 0
    %171 = vmatprep.subr.mxu0 0.0
    %172 = vmatpush1.msra.mxu0 %v75
    %173 = vmatprep.subr.mxu0 0.0
    %174 = vmatpush1.msra.mxu0 %v76
    %175 = vmatprep.subr.mxu0 0.0
    %176 = vmatpush1.msra.mxu0 0.0
    %177 = vmatprep.subr.mxu0 0.0
    %178 = vmatpush1.msra.mxu0 0.0
    %179 = vmatprep.subr.mxu0 0.0
    %180 = vmatpush1.msra.mxu0 0.0
    %181 = vmatprep.subr.mxu0 0.0
    %182 = vmatpush1.msra.mxu0 0.0
    %183 = vmatprep.subr.mxu0 0.0
    %184 = vmatpush1.msra.mxu0 0.0
    %185 = vmatprep.subr.mxu0 0.0
    %186 = vmatpush1.msra.mxu0 0.0
    %187 = vmatprep.subr.mxu0 0.0
    %188 = vmatpush1.msra.mxu0 0.0
    %189 = vmatprep.subr.mxu0 0.0
    %190 = vmatpush1.msra.mxu0 0.0
    %191 = vmatprep.subr.mxu0 0.0
    %192 = vmatpush1.msra.mxu0 0.0
    %193 = vmatprep.subr.mxu0 0.0
    %194 = vmatpush1.msra.mxu0 0.0
    %195 = vmatprep.subr.mxu0 0.0
    %196 = vmatpush1.msra.mxu0 0.0
    %197 = vmatprep.subr.mxu0 0.0
    %198 = vmatpush1.msra.mxu0 0.0
    %199 = vmatprep.subr.mxu0 0.0
    %200 = vmatpush1.msra.mxu0 0.0
    %201 = vmatprep.subr.mxu0 0.0
    %202 = vmatpush1.msra.mxu0 0.0
    %203 = vmatprep.subr.mxu0 0.0
    %204 = vmatpush1.msra.mxu0 0.0
    %205 = vmatprep.subr.mxu0 0.0
    %206 = vmatpush1.msra.mxu0 0.0
    %207 = vmatprep.subr.mxu0 0.0
    %208 = vmatpush1.msra.mxu0 0.0
    %209 = vmatprep.subr.mxu0 0.0
    %210 = vmatpush1.msra.mxu0 0.0
    %211 = vmatprep.subr.mxu0 0.0
    %212 = vmatpush1.msra.mxu0 0.0
    %213 = vmatprep.subr.mxu0 0.0
    %214 = vmatpush1.msra.mxu0 0.0
    %215 = vmatprep.subr.mxu0 0.0
    %216 = vmatpush1.msra.mxu0 0.0
    %217 = vmatprep.subr.mxu0 0.0
    %218 = vmatpush1.msra.mxu0 0.0
    %219 = vmatprep.subr.mxu0 0.0
    %220 = vmatpush1.msra.mxu0 0.0
    %221 = vmatprep.subr.mxu0 0.0
    %222 = vmatpush1.msra.mxu0 0.0
    %223 = vmatprep.subr.mxu0 0.0
    %224 = vmatpush1.msra.mxu0 0.0
    %225 = vmatprep.subr.mxu0 0.0
    %226 = vmatpush1.msra.mxu0 0.0
    %227 = vmatprep.subr.mxu0 0.0
    %228 = vmatpush1.msra.mxu0 0.0
    %229 = vmatprep.subr.mxu0 0.0
    %230 = vmatpush1.msra.mxu0 0.0
    %231 = vmatprep.subr.mxu0 0.0
    %232 = vmatpush1.msra.mxu0 0.0
    %233 = vmatprep.subr.mxu0 0.0
    %234 = vmatpush1.msra.mxu0 0.0
    %235 = vmatprep.mubr.f32.mxu0 0.0
    %236 = vmatmul.mubr.f32.gmra.mrb[0].mxu0 %v166
    %v237 = vpop.f32.mrb[0].mxu0
    %v238 = vadd.f32 0.0, %v237
    %v239 = vpop.f32.mrb[0].mxu0
    %240 = vmatprep.mubr.f32.mxu0 0.0
    %241 = vmatmul.mubr.f32.gmra.mrb[0].mxu0 %v169
    %v242 = vpop.f32.mrb[0].mxu0
    %v243 = vadd.f32 0.0, %v242
    %v244 = vpop.f32.mrb[0].mxu0
    %245 = vdwg.mxu0
    %v246 = vmul.f32 %v238, %v238
    %v247 = vmul.f32 %v243, %v243
    %v248 = vsel %vm83, %v246, 0.0
    %v249 = vsel %vm83, %v247, 0.0
    %v250 = vadd.f32 %v248, %v249
    %251 = vadd.xlane.f32.xlu0 %v250
    %v252 = vpop.xlane.xlu0 %251
    %v253 = vrot.slane %v252, 4
    %v254 = vadd.f32 %v252, %v253
    %v255 = vrot.slane %v254, 2
    %v256 = vadd.f32 %v254, %v255
    %v257 = vrot.slane %v256, 1
    %v258 = vadd.f32 %v256, %v257
    %s259 = vtos %v258
    %v260 = vstv %s259
    %v261 = vadd.f32 %v260, 0.0
    %s262 = scalar_lea.vmem [#allocation7], 16
    %v263 = vld [vmem:[%s262] sm:$0xff]
    %v264 = vld [vmem:[%s262 + $0x8] sm:$0xff]
    %s265 = scalar_lea.vmem [#allocation8], 16
    %v266 = vld [vmem:[%s265] sm:$0xff]
    %v267 = vld [vmem:[%s265 + $0x8] sm:$0xff]
    %v268 = vsub.f32 %v263, %v266
    %v269 = vsub.f32 %v264, %v267
    %270 = vmatprep.subr.mxu0 0.0
    %271 = vmatpush1.msra.mxu0 %v268
    %272 = vmatprep.subr.mxu0 0.0
    %273 = vmatpush1.msra.mxu0 %v269
    %274 = vmatprep.subr.mxu0 0.0
    %275 = vmatpush1.msra.mxu0 0.0
    %276 = vmatprep.subr.mxu0 0.0
    %277 = vmatpush1.msra.mxu0 0.0
    %278 = vmatprep.subr.mxu0 0.0
    %279 = vmatpush1.msra.mxu0 0.0
    %280 = vmatprep.subr.mxu0 0.0
    %281 = vmatpush1.msra.mxu0 0.0
    %282 = vmatprep.subr.mxu0 0.0
    %283 = vmatpush1.msra.mxu0 0.0
    %284 = vmatprep.subr.mxu0 0.0
    %285 = vmatpush1.msra.mxu0 0.0
    %286 = vmatprep.subr.mxu0 0.0
    %287 = vmatpush1.msra.mxu0 0.0
    %288 = vmatprep.subr.mxu0 0.0
    %289 = vmatpush1.msra.mxu0 0.0
    %290 = vmatprep.subr.mxu0 0.0
    %291 = vmatpush1.msra.mxu0 0.0
    %292 = vmatprep.subr.mxu0 0.0
    %293 = vmatpush1.msra.mxu0 0.0
    %294 = vmatprep.subr.mxu0 0.0
    %295 = vmatpush1.msra.mxu0 0.0
    %296 = vmatprep.subr.mxu0 0.0
    %297 = vmatpush1.msra.mxu0 0.0
    %298 = vmatprep.subr.mxu0 0.0
    %299 = vmatpush1.msra.mxu0 0.0
    %300 = vmatprep.subr.mxu0 0.0
    %301 = vmatpush1.msra.mxu0 0.0
    %302 = vmatprep.subr.mxu0 0.0
    %303 = vmatpush1.msra.mxu0 0.0
    %304 = vmatprep.subr.mxu0 0.0
    %305 = vmatpush1.msra.mxu0 0.0
    %306 = vmatprep.subr.mxu0 0.0
    %307 = vmatpush1.msra.mxu0 0.0
    %308 = vmatprep.subr.mxu0 0.0
    %309 = vmatpush1.msra.mxu0 0.0
    %310 = vmatprep.subr.mxu0 0.0
    %311 = vmatpush1.msra.mxu0 0.0
    %312 = vmatprep.subr.mxu0 0.0
    %313 = vmatpush1.msra.mxu0 0.0
    %314 = vmatprep.subr.mxu0 0.0
    %315 = vmatpush1.msra.mxu0 0.0
    %316 = vmatprep.subr.mxu0 0.0
    %317 = vmatpush1.msra.mxu0 0.0
    %318 = vmatprep.subr.mxu0 0.0
    %319 = vmatpush1.msra.mxu0 0.0
    %320 = vmatprep.subr.mxu0 0.0
    %321 = vmatpush1.msra.mxu0 0.0
    %322 = vmatprep.subr.mxu0 0.0
    %323 = vmatpush1.msra.mxu0 0.0
    %324 = vmatprep.subr.mxu0 0.0
    %325 = vmatpush1.msra.mxu0 0.0
    %326 = vmatprep.subr.mxu0 0.0
    %327 = vmatpush1.msra.mxu0 0.0
    %328 = vmatprep.subr.mxu0 0.0
    %329 = vmatpush1.msra.mxu0 0.0
    %330 = vmatprep.subr.mxu0 0.0
    %331 = vmatpush1.msra.mxu0 0.0
    %332 = vmatprep.subr.mxu0 0.0
    %333 = vmatpush1.msra.mxu0 0.0
    %334 = vmatprep.mubr.f32.mxu0 0.0
    %335 = vmatmul.mubr.f32.gmra.mrb[0].mxu0 %v85
    %v336 = vpop.f32.mrb[0].mxu0
    %v337 = vadd.f32 0.0, %v336
    %v338 = vpop.f32.mrb[0].mxu0
    %339 = vmatprep.mubr.f32.mxu0 0.0
    %340 = vmatmul.mubr.f32.gmra.mrb[0].mxu0 %v88
    %v341 = vpop.f32.mrb[0].mxu0
    %v342 = vadd.f32 0.0, %v341
    %v343 = vpop.f32.mrb[0].mxu0
    %344 = vdwg.mxu0
    %v346 = vsel %vm83, %v337, 0
    %v349 = vsel %vm83, %v342, 0
    %351 = vmatprep.subr.mxu0 0.0
    %352 = vmatpush1.msra.mxu0 %v75
    %353 = vmatprep.subr.mxu0 0.0
    %354 = vmatpush1.msra.mxu0 %v76
    %355 = vmatprep.subr.mxu0 0.0
    %356 = vmatpush1.msra.mxu0 0.0
    %357 = vmatprep.subr.mxu0 0.0
    %358 = vmatpush1.msra.mxu0 0.0
    %359 = vmatprep.subr.mxu0 0.0
    %360 = vmatpush1.msra.mxu0 0.0
    %361 = vmatprep.subr.mxu0 0.0
    %362 = vmatpush1.msra.mxu0 0.0
    %363 = vmatprep.subr.mxu0 0.0
    %364 = vmatpush1.msra.mxu0 0.0
    %365 = vmatprep.subr.mxu0 0.0
    %366 = vmatpush1.msra.mxu0 0.0
    %367 = vmatprep.subr.mxu0 0.0
    %368 = vmatpush1.msra.mxu0 0.0
    %369 = vmatprep.subr.mxu0 0.0
    %370 = vmatpush1.msra.mxu0 0.0
    %371 = vmatprep.subr.mxu0 0.0
    %372 = vmatpush1.msra.mxu0 0.0
    %373 = vmatprep.subr.mxu0 0.0
    %374 = vmatpush1.msra.mxu0 0.0
    %375 = vmatprep.subr.mxu0 0.0
    %376 = vmatpush1.msra.mxu0 0.0
    %377 = vmatprep.subr.mxu0 0.0
    %378 = vmatpush1.msra.mxu0 0.0
    %379 = vmatprep.subr.mxu0 0.0
    %380 = vmatpush1.msra.mxu0 0.0
    %381 = vmatprep.subr.mxu0 0.0
    %382 = vmatpush1.msra.mxu0 0.0
    %383 = vmatprep.subr.mxu0 0.0
    %384 = vmatpush1.msra.mxu0 0.0
    %385 = vmatprep.subr.mxu0 0.0
    %386 = vmatpush1.msra.mxu0 0.0
    %387 = vmatprep.subr.mxu0 0.0
    %388 = vmatpush1.msra.mxu0 0.0
    %389 = vmatprep.subr.mxu0 0.0
    %390 = vmatpush1.msra.mxu0 0.0
    %391 = vmatprep.subr.mxu0 0.0
    %392 = vmatpush1.msra.mxu0 0.0
    %393 = vmatprep.subr.mxu0 0.0
    %394 = vmatpush1.msra.mxu0 0.0
    %395 = vmatprep.subr.mxu0 0.0
    %396 = vmatpush1.msra.mxu0 0.0
    %397 = vmatprep.subr.mxu0 0.0
    %398 = vmatpush1.msra.mxu0 0.0
    %399 = vmatprep.subr.mxu0 0.0
    %400 = vmatpush1.msra.mxu0 0.0
    %401 = vmatprep.subr.mxu0 0.0
    %402 = vmatpush1.msra.mxu0 0.0
    %403 = vmatprep.subr.mxu0 0.0
    %404 = vmatpush1.msra.mxu0 0.0
    %405 = vmatprep.subr.mxu0 0.0
    %406 = vmatpush1.msra.mxu0 0.0
    %407 = vmatprep.subr.mxu0 0.0
    %408 = vmatpush1.msra.mxu0 0.0
    %409 = vmatprep.subr.mxu0 0.0
    %410 = vmatpush1.msra.mxu0 0.0
    %411 = vmatprep.subr.mxu0 0.0
    %412 = vmatpush1.msra.mxu0 0.0
    %413 = vmatprep.subr.mxu0 0.0
    %414 = vmatpush1.msra.mxu0 0.0
    %415 = vmatprep.mubr.f32.mxu0 0.0
    %416 = vmatmul.mubr.f32.gmra.mrb[0].mxu0 %v346
    %v417 = vpop.f32.mrb[0].mxu0
    %v418 = vadd.f32 0.0, %v417
    %v419 = vpop.f32.mrb[0].mxu0
    %420 = vmatprep.mubr.f32.mxu0 0.0
    %421 = vmatmul.mubr.f32.gmra.mrb[0].mxu0 %v349
    %v422 = vpop.f32.mrb[0].mxu0
    %v423 = vadd.f32 0.0, %v422
    %v424 = vpop.f32.mrb[0].mxu0
    %425 = vdwg.mxu0
    %v426 = vmul.f32 %v418, %v418
    %v427 = vmul.f32 %v423, %v423
    %v428 = vsel %vm83, %v426, 0.0
    %v429 = vsel %vm83, %v427, 0.0
    %v430 = vadd.f32 %v428, %v429
    %431 = vadd.xlane.f32.xlu0 %v430
    %v432 = vpop.xlane.xlu0 %431
    %v433 = vrot.slane %v432, 4
    %v434 = vadd.f32 %v432, %v433
    %v435 = vrot.slane %v434, 2
    %v436 = vadd.f32 %v434, %v435
    %v437 = vrot.slane %v436, 1
    %v438 = vadd.f32 %v436, %v437
    %s439 = vtos %v438
    %v440 = vstv %s439
    %v441 = vadd.f32 %v261, %v440
    %s442 = scalar_lea.vmem [#allocation7], 32
    %v443 = vld [vmem:[%s442] sm:$0xff]
    %v444 = vld [vmem:[%s442 + $0x8] sm:$0xff]
    %s445 = scalar_lea.vmem [#allocation8], 32
    %v446 = vld [vmem:[%s445] sm:$0xff]
    %v447 = vld [vmem:[%s445 + $0x8] sm:$0xff]
    %v448 = vsub.f32 %v443, %v446
    %v449 = vsub.f32 %v444, %v447
    %450 = vmatprep.subr.mxu0 0.0
    %451 = vmatpush1.msra.mxu0 %v448
    %452 = vmatprep.subr.mxu0 0.0
    %453 = vmatpush1.msra.mxu0 %v449
    %454 = vmatprep.subr.mxu0 0.0
    %455 = vmatpush1.msra.mxu0 0.0
    %456 = vmatprep.subr.mxu0 0.0
    %457 = vmatpush1.msra.mxu0 0.0
    %458 = vmatprep.subr.mxu0 0.0
    %459 = vmatpush1.msra.mxu0 0.0
    %460 = vmatprep.subr.mxu0 0.0
    %461 = vmatpush1.msra.mxu0 0.0
    %462 = vmatprep.subr.mxu0 0.0
    %463 = vmatpush1.msra.mxu0 0.0
    %464 = vmatprep.subr.mxu0 0.0
    %465 = vmatpush1.msra.mxu0 0.0
    %466 = vmatprep.subr.mxu0 0.0
    %467 = vmatpush1.msra.mxu0 0.0
    %468 = vmatprep.subr.mxu0 0.0
    %469 = vmatpush1.msra.mxu0 0.0
    %470 = vmatprep.subr.mxu0 0.0
    %471 = vmatpush1.msra.mxu0 0.0
    %472 = vmatprep.subr.mxu0 0.0
    %473 = vmatpush1.msra.mxu0 0.0
    %474 = vmatprep.subr.mxu0 0.0
    %475 = vmatpush1.msra.mxu0 0.0
    %476 = vmatprep.subr.mxu0 0.0
    %477 = vmatpush1.msra.mxu0 0.0
    %478 = vmatprep.subr.mxu0 0.0
    %479 = vmatpush1.msra.mxu0 0.0
    %480 = vmatprep.subr.mxu0 0.0
    %481 = vmatpush1.msra.mxu0 0.0
    %482 = vmatprep.subr.mxu0 0.0
    %483 = vmatpush1.msra.mxu0 0.0
    %484 = vmatprep.subr.mxu0 0.0
    %485 = vmatpush1.msra.mxu0 0.0
    %486 = vmatprep.subr.mxu0 0.0
    %487 = vmatpush1.msra.mxu0 0.0
    %488 = vmatprep.subr.mxu0 0.0
    %489 = vmatpush1.msra.mxu0 0.0
    %490 = vmatprep.subr.mxu0 0.0
    %491 = vmatpush1.msra.mxu0 0.0
    %492 = vmatprep.subr.mxu0 0.0
    %493 = vmatpush1.msra.mxu0 0.0
    %494 = vmatprep.subr.mxu0 0.0
    %495 = vmatpush1.msra.mxu0 0.0
    %496 = vmatprep.subr.mxu0 0.0
    %497 = vmatpush1.msra.mxu0 0.0
    %498 = vmatprep.subr.mxu0 0.0
    %499 = vmatpush1.msra.mxu0 0.0
    %500 = vmatprep.subr.mxu0 0.0
    %501 = vmatpush1.msra.mxu0 0.0
    %502 = vmatprep.subr.mxu0 0.0
    %503 = vmatpush1.msra.mxu0 0.0
    %504 = vmatprep.subr.mxu0 0.0
    %505 = vmatpush1.msra.mxu0 0.0
    %506 = vmatprep.subr.mxu0 0.0
    %507 = vmatpush1.msra.mxu0 0.0
    %508 = vmatprep.subr.mxu0 0.0
    %509 = vmatpush1.msra.mxu0 0.0
    %510 = vmatprep.subr.mxu0 0.0
    %511 = vmatpush1.msra.mxu0 0.0
    %512 = vmatprep.subr.mxu0 0.0
    %513 = vmatpush1.msra.mxu0 0.0
    %514 = vmatprep.mubr.f32.mxu0 0.0
    %515 = vmatmul.mubr.f32.gmra.mrb[0].mxu0 %v85
    %v516 = vpop.f32.mrb[0].mxu0
    %v517 = vadd.f32 0.0, %v516
    %v518 = vpop.f32.mrb[0].mxu0
    %519 = vmatprep.mubr.f32.mxu0 0.0
    %520 = vmatmul.mubr.f32.gmra.mrb[0].mxu0 %v88
    %v521 = vpop.f32.mrb[0].mxu0
    %v522 = vadd.f32 0.0, %v521
    %v523 = vpop.f32.mrb[0].mxu0
    %524 = vdwg.mxu0
    %v526 = vsel %vm83, %v517, 0
    %v529 = vsel %vm83, %v522, 0
    %531 = vmatprep.subr.mxu0 0.0
    %532 = vmatpush1.msra.mxu0 %v75
    %533 = vmatprep.subr.mxu0 0.0
    %534 = vmatpush1.msra.mxu0 %v76
    %535 = vmatprep.subr.mxu0 0.0
    %536 = vmatpush1.msra.mxu0 0.0
    %537 = vmatprep.subr.mxu0 0.0
    %538 = vmatpush1.msra.mxu0 0.0
    %539 = vmatprep.subr.mxu0 0.0
    %540 = vmatpush1.msra.mxu0 0.0
    %541 = vmatprep.subr.mxu0 0.0
    %542 = vmatpush1.msra.mxu0 0.0
    %543 = vmatprep.subr.mxu0 0.0
    %544 = vmatpush1.msra.mxu0 0.0
    %545 = vmatprep.subr.mxu0 0.0
    %546 = vmatpush1.msra.mxu0 0.0
    %547 = vmatprep.subr.mxu0 0.0
    %548 = vmatpush1.msra.mxu0 0.0
    %549 = vmatprep.subr.mxu0 0.0
    %550 = vmatpush1.msra.mxu0 0.0
    %551 = vmatprep.subr.mxu0 0.0
    %552 = vmatpush1.msra.mxu0 0.0
    %553 = vmatprep.subr.mxu0 0.0
    %554 = vmatpush1.msra.mxu0 0.0
    %555 = vmatprep.subr.mxu0 0.0
    %556 = vmatpush1.msra.mxu0 0.0
    %557 = vmatprep.subr.mxu0 0.0
    %558 = vmatpush1.msra.mxu0 0.0
    %559 = vmatprep.subr.mxu0 0.0
    %560 = vmatpush1.msra.mxu0 0.0
    %561 = vmatprep.subr.mxu0 0.0
    %562 = vmatpush1.msra.mxu0 0.0
    %563 = vmatprep.subr.mxu0 0.0
    %564 = vmatpush1.msra.mxu0 0.0
    %565 = vmatprep.subr.mxu0 0.0
    %566 = vmatpush1.msra.mxu0 0.0
    %567 = vmatprep.subr.mxu0 0.0
    %568 = vmatpush1.msra.mxu0 0.0
    %569 = vmatprep.subr.mxu0 0.0
    %570 = vmatpush1.msra.mxu0 0.0
    %571 = vmatprep.subr.mxu0 0.0
    %572 = vmatpush1.msra.mxu0 0.0
    %573 = vmatprep.subr.mxu0 0.0
    %574 = vmatpush1.msra.mxu0 0.0
    %575 = vmatprep.subr.mxu0 0.0
    %576 = vmatpush1.msra.mxu0 0.0
    %577 = vmatprep.subr.mxu0 0.0
    %578 = vmatpush1.msra.mxu0 0.0
    %579 = vmatprep.subr.mxu0 0.0
    %580 = vmatpush1.msra.mxu0 0.0
    %581 = vmatprep.subr.mxu0 0.0
    %582 = vmatpush1.msra.mxu0 0.0
    %583 = vmatprep.subr.mxu0 0.0
    %584 = vmatpush1.msra.mxu0 0.0
    %585 = vmatprep.subr.mxu0 0.0
    %586 = vmatpush1.msra.mxu0 0.0
    %587 = vmatprep.subr.mxu0 0.0
    %588 = vmatpush1.msra.mxu0 0.0
    %589 = vmatprep.subr.mxu0 0.0
    %590 = vmatpush1.msra.mxu0 0.0
    %591 = vmatprep.subr.mxu0 0.0
    %592 = vmatpush1.msra.mxu0 0.0
    %593 = vmatprep.subr.mxu0 0.0
    %594 = vmatpush1.msra.mxu0 0.0
    %595 = vmatprep.mubr.f32.mxu0 0.0
    %596 = vmatmul.mubr.f32.gmra.mrb[0].mxu0 %v526
    %v597 = vpop.f32.mrb[0].mxu0
    %v598 = vadd.f32 0.0, %v597
    %v599 = vpop.f32.mrb[0].mxu0
    %600 = vmatprep.mubr.f32.mxu0 0.0
    %601 = vmatmul.mubr.f32.gmra.mrb[0].mxu0 %v529
    %v602 = vpop.f32.mrb[0].mxu0
    %v603 = vadd.f32 0.0, %v602
    %v604 = vpop.f32.mrb[0].mxu0
    %605 = vdwg.mxu0
    %v606 = vmul.f32 %v598, %v598
    %v607 = vmul.f32 %v603, %v603
    %v608 = vsel %vm83, %v606, 0.0
    %v609 = vsel %vm83, %v607, 0.0
    %v610 = vadd.f32 %v608, %v609
    %611 = vadd.xlane.f32.xlu0 %v610
    %v612 = vpop.xlane.xlu0 %611
    %v613 = vrot.slane %v612, 4
    %v614 = vadd.f32 %v612, %v613
    %v615 = vrot.slane %v614, 2
    %v616 = vadd.f32 %v614, %v615
    %v617 = vrot.slane %v616, 1
    %v618 = vadd.f32 %v616, %v617
    %s619 = vtos %v618
    %v620 = vstv %s619
    %v621 = vadd.f32 %v441, %v620
    %s622 = scalar_lea.vmem [#allocation7], 48
    %v623 = vld [vmem:[%s622] sm:$0xff]
    %v624 = vld [vmem:[%s622 + $0x8] sm:$0xff]
    %s625 = scalar_lea.vmem [#allocation8], 48
    %v626 = vld [vmem:[%s625] sm:$0xff]
    %v627 = vld [vmem:[%s625 + $0x8] sm:$0xff]
    %v628 = vsub.f32 %v623, %v626
    %v629 = vsub.f32 %v624, %v627
    %630 = vmatprep.subr.mxu0 0.0
    %631 = vmatpush1.msra.mxu0 %v628
    %632 = vmatprep.subr.mxu0 0.0
    %633 = vmatpush1.msra.mxu0 %v629
    %634 = vmatprep.subr.mxu0 0.0
    %635 = vmatpush1.msra.mxu0 0.0
    %636 = vmatprep.subr.mxu0 0.0
    %637 = vmatpush1.msra.mxu0 0.0
    %638 = vmatprep.subr.mxu0 0.0
    %639 = vmatpush1.msra.mxu0 0.0
    %640 = vmatprep.subr.mxu0 0.0
    %641 = vmatpush1.msra.mxu0 0.0
    %642 = vmatprep.subr.mxu0 0.0
    %643 = vmatpush1.msra.mxu0 0.0
    %644 = vmatprep.subr.mxu0 0.0
    %645 = vmatpush1.msra.mxu0 0.0
    %646 = vmatprep.subr.mxu0 0.0
    %647 = vmatpush1.msra.mxu0 0.0
    %648 = vmatprep.subr.mxu0 0.0
    %649 = vmatpush1.msra.mxu0 0.0
    %650 = vmatprep.subr.mxu0 0.0
    %651 = vmatpush1.msra.mxu0 0.0
    %652 = vmatprep.subr.mxu0 0.0
    %653 = vmatpush1.msra.mxu0 0.0
    %654 = vmatprep.subr.mxu0 0.0
    %655 = vmatpush1.msra.mxu0 0.0
    %656 = vmatprep.subr.mxu0 0.0
    %657 = vmatpush1.msra.mxu0 0.0
    %658 = vmatprep.subr.mxu0 0.0
    %659 = vmatpush1.msra.mxu0 0.0
    %660 = vmatprep.subr.mxu0 0.0
    %661 = vmatpush1.msra.mxu0 0.0
    %662 = vmatprep.subr.mxu0 0.0
    %663 = vmatpush1.msra.mxu0 0.0
    %664 = vmatprep.subr.mxu0 0.0
    %665 = vmatpush1.msra.mxu0 0.0
    %666 = vmatprep.subr.mxu0 0.0
    %667 = vmatpush1.msra.mxu0 0.0
    %668 = vmatprep.subr.mxu0 0.0
    %669 = vmatpush1.msra.mxu0 0.0
    %670 = vmatprep.subr.mxu0 0.0
    %671 = vmatpush1.msra.mxu0 0.0
    %672 = vmatprep.subr.mxu0 0.0
    %673 = vmatpush1.msra.mxu0 0.0
    %674 = vmatprep.subr.mxu0 0.0
    %675 = vmatpush1.msra.mxu0 0.0
    %676 = vmatprep.subr.mxu0 0.0
    %677 = vmatpush1.msra.mxu0 0.0
    %678 = vmatprep.subr.mxu0 0.0
    %679 = vmatpush1.msra.mxu0 0.0
    %680 = vmatprep.subr.mxu0 0.0
    %681 = vmatpush1.msra.mxu0 0.0
    %682 = vmatprep.subr.mxu0 0.0
    %683 = vmatpush1.msra.mxu0 0.0
    %684 = vmatprep.subr.mxu0 0.0
    %685 = vmatpush1.msra.mxu0 0.0
    %686 = vmatprep.subr.mxu0 0.0
    %687 = vmatpush1.msra.mxu0 0.0
    %688 = vmatprep.subr.mxu0 0.0
    %689 = vmatpush1.msra.mxu0 0.0
    %690 = vmatprep.subr.mxu0 0.0
    %691 = vmatpush1.msra.mxu0 0.0
    %692 = vmatprep.subr.mxu0 0.0
    %693 = vmatpush1.msra.mxu0 0.0
    %694 = vmatprep.mubr.f32.mxu0 0.0
    %695 = vmatmul.mubr.f32.gmra.mrb[0].mxu0 %v85
    %v696 = vpop.f32.mrb[0].mxu0
    %v697 = vadd.f32 0.0, %v696
    %v698 = vpop.f32.mrb[0].mxu0
    %699 = vmatprep.mubr.f32.mxu0 0.0
    %700 = vmatmul.mubr.f32.gmra.mrb[0].mxu0 %v88
    %v701 = vpop.f32.mrb[0].mxu0
    %v702 = vadd.f32 0.0, %v701
    %v703 = vpop.f32.mrb[0].mxu0
    %704 = vdwg.mxu0
    %v706 = vsel %vm83, %v697, 0
    %v709 = vsel %vm83, %v702, 0
    %711 = vmatprep.subr.mxu0 0.0
    %712 = vmatpush1.msra.mxu0 %v75
    %713 = vmatprep.subr.mxu0 0.0
    %714 = vmatpush1.msra.mxu0 %v76
    %715 = vmatprep.subr.mxu0 0.0
    %716 = vmatpush1.msra.mxu0 0.0
    %717 = vmatprep.subr.mxu0 0.0
    %718 = vmatpush1.msra.mxu0 0.0
    %719 = vmatprep.subr.mxu0 0.0
    %720 = vmatpush1.msra.mxu0 0.0
    %721 = vmatprep.subr.mxu0 0.0
    %722 = vmatpush1.msra.mxu0 0.0
    %723 = vmatprep.subr.mxu0 0.0
    %724 = vmatpush1.msra.mxu0 0.0
    %725 = vmatprep.subr.mxu0 0.0
    %726 = vmatpush1.msra.mxu0 0.0
    %727 = vmatprep.subr.mxu0 0.0
    %728 = vmatpush1.msra.mxu0 0.0
    %729 = vmatprep.subr.mxu0 0.0
    %730 = vmatpush1.msra.mxu0 0.0
    %731 = vmatprep.subr.mxu0 0.0
    %732 = vmatpush1.msra.mxu0 0.0
    %733 = vmatprep.subr.mxu0 0.0
    %734 = vmatpush1.msra.mxu0 0.0
    %735 = vmatprep.subr.mxu0 0.0
    %736 = vmatpush1.msra.mxu0 0.0
    %737 = vmatprep.subr.mxu0 0.0
    %738 = vmatpush1.msra.mxu0 0.0
    %739 = vmatprep.subr.mxu0 0.0
    %740 = vmatpush1.msra.mxu0 0.0
    %741 = vmatprep.subr.mxu0 0.0
    %742 = vmatpush1.msra.mxu0 0.0
    %743 = vmatprep.subr.mxu0 0.0
    %744 = vmatpush1.msra.mxu0 0.0
    %745 = vmatprep.subr.mxu0 0.0
    %746 = vmatpush1.msra.mxu0 0.0
    %747 = vmatprep.subr.mxu0 0.0
    %748 = vmatpush1.msra.mxu0 0.0
    %749 = vmatprep.subr.mxu0 0.0
    %750 = vmatpush1.msra.mxu0 0.0
    %751 = vmatprep.subr.mxu0 0.0
    %752 = vmatpush1.msra.mxu0 0.0
    %753 = vmatprep.subr.mxu0 0.0
    %754 = vmatpush1.msra.mxu0 0.0
    %755 = vmatprep.subr.mxu0 0.0
    %756 = vmatpush1.msra.mxu0 0.0
    %757 = vmatprep.subr.mxu0 0.0
    %758 = vmatpush1.msra.mxu0 0.0
    %759 = vmatprep.subr.mxu0 0.0
    %760 = vmatpush1.msra.mxu0 0.0
    %761 = vmatprep.subr.mxu0 0.0
    %762 = vmatpush1.msra.mxu0 0.0
    %763 = vmatprep.subr.mxu0 0.0
    %764 = vmatpush1.msra.mxu0 0.0
    %765 = vmatprep.subr.mxu0 0.0
    %766 = vmatpush1.msra.mxu0 0.0
    %767 = vmatprep.subr.mxu0 0.0
    %768 = vmatpush1.msra.mxu0 0.0
    %769 = vmatprep.subr.mxu0 0.0
    %770 = vmatpush1.msra.mxu0 0.0
    %771 = vmatprep.subr.mxu0 0.0
    %772 = vmatpush1.msra.mxu0 0.0
    %773 = vmatprep.subr.mxu0 0.0
    %774 = vmatpush1.msra.mxu0 0.0
    %775 = vmatprep.mubr.f32.mxu0 0.0
    %776 = vmatmul.mubr.f32.gmra.mrb[0].mxu0 %v706
    %v777 = vpop.f32.mrb[0].mxu0
    %v778 = vadd.f32 0.0, %v777
    %v779 = vpop.f32.mrb[0].mxu0
    %780 = vmatprep.mubr.f32.mxu0 0.0
    %781 = vmatmul.mubr.f32.gmra.mrb[0].mxu0 %v709
    %v782 = vpop.f32.mrb[0].mxu0
    %v783 = vadd.f32 0.0, %v782
    %v784 = vpop.f32.mrb[0].mxu0
    %785 = vdwg.mxu0
    %v786 = vmul.f32 %v778, %v778
    %v787 = vmul.f32 %v783, %v783
    %v788 = vsel %vm83, %v786, 0.0
    %v789 = vsel %vm83, %v787, 0.0
    %v790 = vadd.f32 %v788, %v789
    %791 = vadd.xlane.f32.xlu0 %v790
    %v792 = vpop.xlane.xlu0 %791
    %v793 = vrot.slane %v792, 4
    %v794 = vadd.f32 %v792, %v793
    %v795 = vrot.slane %v794, 2
    %v796 = vadd.f32 %v794, %v795
    %v797 = vrot.slane %v796, 1
    %v798 = vadd.f32 %v796, %v797
    %s799 = vtos %v798
    %v800 = vstv %s799
    %v801 = vadd.f32 %v621, %v800
    %s802 = scalar_lea.vmem [#allocation7], 64
    %v803 = vld [vmem:[%s802] sm:$0xff]
    %v804 = vld [vmem:[%s802 + $0x8] sm:$0xff]
    %s805 = scalar_lea.vmem [#allocation8], 64
    %v806 = vld [vmem:[%s805] sm:$0xff]
    %v807 = vld [vmem:[%s805 + $0x8] sm:$0xff]
    %v808 = vsub.f32 %v803, %v806
    %v809 = vsub.f32 %v804, %v807
    %810 = vmatprep.subr.mxu0 0.0
    %811 = vmatpush1.msra.mxu0 %v808
    %812 = vmatprep.subr.mxu0 0.0
    %813 = vmatpush1.msra.mxu0 %v809
    %814 = vmatprep.subr.mxu0 0.0
    %815 = vmatpush1.msra.mxu0 0.0
    %816 = vmatprep.subr.mxu0 0.0
    %817 = vmatpush1.msra.mxu0 0.0
    %818 = vmatprep.subr.mxu0 0.0
    %819 = vmatpush1.msra.mxu0 0.0
    %820 = vmatprep.subr.mxu0 0.0
    %821 = vmatpush1.msra.mxu0 0.0
    %822 = vmatprep.subr.mxu0 0.0
    %823 = vmatpush1.msra.mxu0 0.0
    %824 = vmatprep.subr.mxu0 0.0
    %825 = vmatpush1.msra.mxu0 0.0
    %826 = vmatprep.subr.mxu0 0.0
    %827 = vmatpush1.msra.mxu0 0.0
    %828 = vmatprep.subr.mxu0 0.0
    %829 = vmatpush1.msra.mxu0 0.0
    %830 = vmatprep.subr.mxu0 0.0
    %831 = vmatpush1.msra.mxu0 0.0
    %832 = vmatprep.subr.mxu0 0.0
    %833 = vmatpush1.msra.mxu0 0.0
    %834 = vmatprep.subr.mxu0 0.0
    %835 = vmatpush1.msra.mxu0 0.0
    %836 = vmatprep.subr.mxu0 0.0
    %837 = vmatpush1.msra.mxu0 0.0
    %838 = vmatprep.subr.mxu0 0.0
    %839 = vmatpush1.msra.mxu0 0.0
    %840 = vmatprep.subr.mxu0 0.0
    %841 = vmatpush1.msra.mxu0 0.0
    %842 = vmatprep.subr.mxu0 0.0
    %843 = vmatpush1.msra.mxu0 0.0
    %844 = vmatprep.subr.mxu0 0.0
    %845 = vmatpush1.msra.mxu0 0.0
    %846 = vmatprep.subr.mxu0 0.0
    %847 = vmatpush1.msra.mxu0 0.0
    %848 = vmatprep.subr.mxu0 0.0
    %849 = vmatpush1.msra.mxu0 0.0
    %850 = vmatprep.subr.mxu0 0.0
    %851 = vmatpush1.msra.mxu0 0.0
    %852 = vmatprep.subr.mxu0 0.0
    %853 = vmatpush1.msra.mxu0 0.0
    %854 = vmatprep.subr.mxu0 0.0
    %855 = vmatpush1.msra.mxu0 0.0
    %856 = vmatprep.subr.mxu0 0.0
    %857 = vmatpush1.msra.mxu0 0.0
    %858 = vmatprep.subr.mxu0 0.0
    %859 = vmatpush1.msra.mxu0 0.0
    %860 = vmatprep.subr.mxu0 0.0
    %861 = vmatpush1.msra.mxu0 0.0
    %862 = vmatprep.subr.mxu0 0.0
    %863 = vmatpush1.msra.mxu0 0.0
    %864 = vmatprep.subr.mxu0 0.0
    %865 = vmatpush1.msra.mxu0 0.0
    %866 = vmatprep.subr.mxu0 0.0
    %867 = vmatpush1.msra.mxu0 0.0
    %868 = vmatprep.subr.mxu0 0.0
    %869 = vmatpush1.msra.mxu0 0.0
    %870 = vmatprep.subr.mxu0 0.0
    %871 = vmatpush1.msra.mxu0 0.0
    %872 = vmatprep.subr.mxu0 0.0
    %873 = vmatpush1.msra.mxu0 0.0
    %874 = vmatprep.mubr.f32.mxu0 0.0
    %875 = vmatmul.mubr.f32.gmra.mrb[0].mxu0 %v85
    %v876 = vpop.f32.mrb[0].mxu0
    %v877 = vadd.f32 0.0, %v876
    %v878 = vpop.f32.mrb[0].mxu0
    %879 = vmatprep.mubr.f32.mxu0 0.0
    %880 = vmatmul.mubr.f32.gmra.mrb[0].mxu0 %v88
    %v881 = vpop.f32.mrb[0].mxu0
    %v882 = vadd.f32 0.0, %v881
    %v883 = vpop.f32.mrb[0].mxu0
    %884 = vdwg.mxu0
    %v886 = vsel %vm83, %v877, 0
    %v889 = vsel %vm83, %v882, 0
    %891 = vmatprep.subr.mxu0 0.0
    %892 = vmatpush1.msra.mxu0 %v75
    %893 = vmatprep.subr.mxu0 0.0
    %894 = vmatpush1.msra.mxu0 %v76
    %895 = vmatprep.subr.mxu0 0.0
    %896 = vmatpush1.msra.mxu0 0.0
    %897 = vmatprep.subr.mxu0 0.0
    %898 = vmatpush1.msra.mxu0 0.0
    %899 = vmatprep.subr.mxu0 0.0
    %900 = vmatpush1.msra.mxu0 0.0
    %901 = vmatprep.subr.mxu0 0.0
    %902 = vmatpush1.msra.mxu0 0.0
    %903 = vmatprep.subr.mxu0 0.0
    %904 = vmatpush1.msra.mxu0 0.0
    %905 = vmatprep.subr.mxu0 0.0
    %906 = vmatpush1.msra.mxu0 0.0
    %907 = vmatprep.subr.mxu0 0.0
    %908 = vmatpush1.msra.mxu0 0.0
    %909 = vmatprep.subr.mxu0 0.0
    %910 = vmatpush1.msra.mxu0 0.0
    %911 = vmatprep.subr.mxu0 0.0
    %912 = vmatpush1.msra.mxu0 0.0
    %913 = vmatprep.subr.mxu0 0.0
    %914 = vmatpush1.msra.mxu0 0.0
    %915 = vmatprep.subr.mxu0 0.0
    %916 = vmatpush1.msra.mxu0 0.0
    %917 = vmatprep.subr.mxu0 0.0
    %918 = vmatpush1.msra.mxu0 0.0
    %919 = vmatprep.subr.mxu0 0.0
    %920 = vmatpush1.msra.mxu0 0.0
    %921 = vmatprep.subr.mxu0 0.0
    %922 = vmatpush1.msra.mxu0 0.0
    %923 = vmatprep.subr.mxu0 0.0
    %924 = vmatpush1.msra.mxu0 0.0
    %925 = vmatprep.subr.mxu0 0.0
    %926 = vmatpush1.msra.mxu0 0.0
    %927 = vmatprep.subr.mxu0 0.0
    %928 = vmatpush1.msra.mxu0 0.0
    %929 = vmatprep.subr.mxu0 0.0
    %930 = vmatpush1.msra.mxu0 0.0
    %931 = vmatprep.subr.mxu0 0.0
    %932 = vmatpush1.msra.mxu0 0.0
    %933 = vmatprep.subr.mxu0 0.0
    %934 = vmatpush1.msra.mxu0 0.0
    %935 = vmatprep.subr.mxu0 0.0
    %936 = vmatpush1.msra.mxu0 0.0
    %937 = vmatprep.subr.mxu0 0.0
    %938 = vmatpush1.msra.mxu0 0.0
    %939 = vmatprep.subr.mxu0 0.0
    %940 = vmatpush1.msra.mxu0 0.0
    %941 = vmatprep.subr.mxu0 0.0
    %942 = vmatpush1.msra.mxu0 0.0
    %943 = vmatprep.subr.mxu0 0.0
    %944 = vmatpush1.msra.mxu0 0.0
    %945 = vmatprep.subr.mxu0 0.0
    %946 = vmatpush1.msra.mxu0 0.0
    %947 = vmatprep.subr.mxu0 0.0
    %948 = vmatpush1.msra.mxu0 0.0
    %949 = vmatprep.subr.mxu0 0.0
    %950 = vmatpush1.msra.mxu0 0.0
    %951 = vmatprep.subr.mxu0 0.0
    %952 = vmatpush1.msra.mxu0 0.0
    %953 = vmatprep.subr.mxu0 0.0
    %954 = vmatpush1.msra.mxu0 0.0
    %955 = vmatprep.mubr.f32.mxu0 0.0
    %956 = vmatmul.mubr.f32.gmra.mrb[0].mxu0 %v886
    %v957 = vpop.f32.mrb[0].mxu0
    %v958 = vadd.f32 0.0, %v957
    %v959 = vpop.f32.mrb[0].mxu0
    %960 = vmatprep.mubr.f32.mxu0 0.0
    %961 = vmatmul.mubr.f32.gmra.mrb[0].mxu0 %v889
    %v962 = vpop.f32.mrb[0].mxu0
    %v963 = vadd.f32 0.0, %v962
    %v964 = vpop.f32.mrb[0].mxu0
    %965 = vdwg.mxu0
    %v966 = vmul.f32 %v958, %v958
    %v967 = vmul.f32 %v963, %v963
    %v968 = vsel %vm83, %v966, 0.0
    %v969 = vsel %vm83, %v967, 0.0
    %v970 = vadd.f32 %v968, %v969
    %971 = vadd.xlane.f32.xlu0 %v970
    %v972 = vpop.xlane.xlu0 %971
    %v973 = vrot.slane %v972, 4
    %v974 = vadd.f32 %v972, %v973
    %v975 = vrot.slane %v974, 2
    %v976 = vadd.f32 %v974, %v975
    %v977 = vrot.slane %v976, 1
    %v978 = vadd.f32 %v976, %v977
    %s979 = vtos %v978
    %v980 = vstv %s979
    %v981 = vadd.f32 %v801, %v980
    %s982 = scalar_lea.vmem [#allocation7], 80
    %v983 = vld [vmem:[%s982] sm:$0xff]
    %v984 = vld [vmem:[%s982 + $0x8] sm:$0xff]
    %s985 = scalar_lea.vmem [#allocation8], 80
    %v986 = vld [vmem:[%s985] sm:$0xff]
    %v987 = vld [vmem:[%s985 + $0x8] sm:$0xff]
    %v988 = vsub.f32 %v983, %v986
    %v989 = vsub.f32 %v984, %v987
    %990 = vmatprep.subr.mxu0 0.0
    %991 = vmatpush1.msra.mxu0 %v988
    %992 = vmatprep.subr.mxu0 0.0
    %993 = vmatpush1.msra.mxu0 %v989
    %994 = vmatprep.subr.mxu0 0.0
    %995 = vmatpush1.msra.mxu0 0.0
    %996 = vmatprep.subr.mxu0 0.0
    %997 = vmatpush1.msra.mxu0 0.0
    %998 = vmatprep.subr.mxu0 0.0
    %999 = vmatpush1.msra.mxu0 0.0
    %1000 = vmatprep.subr.mxu0 0.0
    %1001 = vmatpush1.msra.mxu0 0.0
    %1002 = vmatprep.subr.mxu0 0.0
    %1003 = vmatpush1.msra.mxu0 0.0
    %1004 = vmatprep.subr.mxu0 0.0
    %1005 = vmatpush1.msra.mxu0 0.0
    %1006 = vmatprep.subr.mxu0 0.0
    %1007 = vmatpush1.msra.mxu0 0.0
    %1008 = vmatprep.subr.mxu0 0.0
    %1009 = vmatpush1.msra.mxu0 0.0
    %1010 = vmatprep.subr.mxu0 0.0
    %1011 = vmatpush1.msra.mxu0 0.0
    %1012 = vmatprep.subr.mxu0 0.0
    %1013 = vmatpush1.msra.mxu0 0.0
    %1014 = vmatprep.subr.mxu0 0.0
    %1015 = vmatpush1.msra.mxu0 0.0
    %1016 = vmatprep.subr.mxu0 0.0
    %1017 = vmatpush1.msra.mxu0 0.0
    %1018 = vmatprep.subr.mxu0 0.0
    %1019 = vmatpush1.msra.mxu0 0.0
    %1020 = vmatprep.subr.mxu0 0.0
    %1021 = vmatpush1.msra.mxu0 0.0
    %1022 = vmatprep.subr.mxu0 0.0
    %1023 = vmatpush1.msra.mxu0 0.0
    %1024 = vmatprep.subr.mxu0 0.0
    %1025 = vmatpush1.msra.mxu0 0.0
    %1026 = vmatprep.subr.mxu0 0.0
    %1027 = vmatpush1.msra.mxu0 0.0
    %1028 = vmatprep.subr.mxu0 0.0
    %1029 = vmatpush1.msra.mxu0 0.0
    %1030 = vmatprep.subr.mxu0 0.0
    %1031 = vmatpush1.msra.mxu0 0.0
    %1032 = vmatprep.subr.mxu0 0.0
    %1033 = vmatpush1.msra.mxu0 0.0
    %1034 = vmatprep.subr.mxu0 0.0
    %1035 = vmatpush1.msra.mxu0 0.0
    %1036 = vmatprep.subr.mxu0 0.0
    %1037 = vmatpush1.msra.mxu0 0.0
    %1038 = vmatprep.subr.mxu0 0.0
    %1039 = vmatpush1.msra.mxu0 0.0
    %1040 = vmatprep.subr.mxu0 0.0
    %1041 = vmatpush1.msra.mxu0 0.0
    %1042 = vmatprep.subr.mxu0 0.0
    %1043 = vmatpush1.msra.mxu0 0.0
    %1044 = vmatprep.subr.mxu0 0.0
    %1045 = vmatpush1.msra.mxu0 0.0
    %1046 = vmatprep.subr.mxu0 0.0
    %1047 = vmatpush1.msra.mxu0 0.0
    %1048 = vmatprep.subr.mxu0 0.0
    %1049 = vmatpush1.msra.mxu0 0.0
    %1050 = vmatprep.subr.mxu0 0.0
    %1051 = vmatpush1.msra.mxu0 0.0
    %1052 = vmatprep.subr.mxu0 0.0
    %1053 = vmatpush1.msra.mxu0 0.0
    %1054 = vmatprep.mubr.f32.mxu0 0.0
    %1055 = vmatmul.mubr.f32.gmra.mrb[0].mxu0 %v85
    %v1056 = vpop.f32.mrb[0].mxu0
    %v1057 = vadd.f32 0.0, %v1056
    %v1058 = vpop.f32.mrb[0].mxu0
    %1059 = vmatprep.mubr.f32.mxu0 0.0
    %1060 = vmatmul.mubr.f32.gmra.mrb[0].mxu0 %v88
    %v1061 = vpop.f32.mrb[0].mxu0
    %v1062 = vadd.f32 0.0, %v1061
    %v1063 = vpop.f32.mrb[0].mxu0
    %1064 = vdwg.mxu0
    %v1066 = vsel %vm83, %v1057, 0
    %v1069 = vsel %vm83, %v1062, 0
    %1071 = vmatprep.subr.mxu0 0.0
    %1072 = vmatpush1.msra.mxu0 %v75
    %1073 = vmatprep.subr.mxu0 0.0
    %1074 = vmatpush1.msra.mxu0 %v76
    %1075 = vmatprep.subr.mxu0 0.0
    %1076 = vmatpush1.msra.mxu0 0.0
    %1077 = vmatprep.subr.mxu0 0.0
    %1078 = vmatpush1.msra.mxu0 0.0
    %1079 = vmatprep.subr.mxu0 0.0
    %1080 = vmatpush1.msra.mxu0 0.0
    %1081 = vmatprep.subr.mxu0 0.0
    %1082 = vmatpush1.msra.mxu0 0.0
    %1083 = vmatprep.subr.mxu0 0.0
    %1084 = vmatpush1.msra.mxu0 0.0
    %1085 = vmatprep.subr.mxu0 0.0
    %1086 = vmatpush1.msra.mxu0 0.0
    %1087 = vmatprep.subr.mxu0 0.0
    %1088 = vmatpush1.msra.mxu0 0.0
    %1089 = vmatprep.subr.mxu0 0.0
    %1090 = vmatpush1.msra.mxu0 0.0
    %1091 = vmatprep.subr.mxu0 0.0
    %1092 = vmatpush1.msra.mxu0 0.0
    %1093 = vmatprep.subr.mxu0 0.0
    %1094 = vmatpush1.msra.mxu0 0.0
    %1095 = vmatprep.subr.mxu0 0.0
    %1096 = vmatpush1.msra.mxu0 0.0
    %1097 = vmatprep.subr.mxu0 0.0
    %1098 = vmatpush1.msra.mxu0 0.0
    %1099 = vmatprep.subr.mxu0 0.0
    %1100 = vmatpush1.msra.mxu0 0.0
    %1101 = vmatprep.subr.mxu0 0.0
    %1102 = vmatpush1.msra.mxu0 0.0
    %1103 = vmatprep.subr.mxu0 0.0
    %1104 = vmatpush1.msra.mxu0 0.0
    %1105 = vmatprep.subr.mxu0 0.0
    %1106 = vmatpush1.msra.mxu0 0.0
    %1107 = vmatprep.subr.mxu0 0.0
    %1108 = vmatpush1.msra.mxu0 0.0
    %1109 = vmatprep.subr.mxu0 0.0
    %1110 = vmatpush1.msra.mxu0 0.0
    %1111 = vmatprep.subr.mxu0 0.0
    %1112 = vmatpush1.msra.mxu0 0.0
    %1113 = vmatprep.subr.mxu0 0.0
    %1114 = vmatpush1.msra.mxu0 0.0
    %1115 = vmatprep.subr.mxu0 0.0
    %1116 = vmatpush1.msra.mxu0 0.0
    %1117 = vmatprep.subr.mxu0 0.0
    %1118 = vmatpush1.msra.mxu0 0.0
    %1119 = vmatprep.subr.mxu0 0.0
    %1120 = vmatpush1.msra.mxu0 0.0
    %1121 = vmatprep.subr.mxu0 0.0
    %1122 = vmatpush1.msra.mxu0 0.0
    %1123 = vmatprep.subr.mxu0 0.0
    %1124 = vmatpush1.msra.mxu0 0.0
    %1125 = vmatprep.subr.mxu0 0.0
    %1126 = vmatpush1.msra.mxu0 0.0
    %1127 = vmatprep.subr.mxu0 0.0
    %1128 = vmatpush1.msra.mxu0 0.0
    %1129 = vmatprep.subr.mxu0 0.0
    %1130 = vmatpush1.msra.mxu0 0.0
    %1131 = vmatprep.subr.mxu0 0.0
    %1132 = vmatpush1.msra.mxu0 0.0
    %1133 = vmatprep.subr.mxu0 0.0
    %1134 = vmatpush1.msra.mxu0 0.0
    %1135 = vmatprep.mubr.f32.mxu0 0.0
    %1136 = vmatmul.mubr.f32.gmra.mrb[0].mxu0 %v1066
    %v1137 = vpop.f32.mrb[0].mxu0
    %v1138 = vadd.f32 0.0, %v1137
    %v1139 = vpop.f32.mrb[0].mxu0
    %1140 = vmatprep.mubr.f32.mxu0 0.0
    %1141 = vmatmul.mubr.f32.gmra.mrb[0].mxu0 %v1069
    %v1142 = vpop.f32.mrb[0].mxu0
    %v1143 = vadd.f32 0.0, %v1142
    %v1144 = vpop.f32.mrb[0].mxu0
    %1145 = vdwg.mxu0
    %v1146 = vmul.f32 %v1138, %v1138
    %v1147 = vmul.f32 %v1143, %v1143
    %v1148 = vsel %vm83, %v1146, 0.0
    %v1149 = vsel %vm83, %v1147, 0.0
    %v1150 = vadd.f32 %v1148, %v1149
    %1151 = vadd.xlane.f32.xlu0 %v1150
    %v1152 = vpop.xlane.xlu0 %1151
    %v1153 = vrot.slane %v1152, 4
    %v1154 = vadd.f32 %v1152, %v1153
    %v1155 = vrot.slane %v1154, 2
    %v1156 = vadd.f32 %v1154, %v1155
    %v1157 = vrot.slane %v1156, 1
    %v1158 = vadd.f32 %v1156, %v1157
    %s1159 = vtos %v1158
    %v1160 = vstv %s1159
    %v1161 = vadd.f32 %v981, %v1160
    %1162 = vst [vmem:[#allocation10] sm:$0xff] %v1161
    // Predicated region
    $region34: #{tpu_custom_call.1} parent=1 // pred_check
      _
    $region35: #{tpu_custom_call.1} parent=1 // pred_check_branch
      %1164 = sbr.rel (0) target = $region37
    $region36: #{tpu_custom_call.1} parent=1 // pred_region
      %s1166 = ssub.s32 128, 128
      %1167 = vsyncadd [#allocation4], %s1166
      %s1169 = sshll.u32 [#allocation10], 4
      %s1170 = int_to_ptr.vmem [resolvable:$true] %s1169
      %1172 = dma.vmem_to_hbm [thread:$0]  %s1170, 128, %s4, [#allocation4]
    $region37: #{tpu_custom_call.1} parent=1 // pred_fallthru
      _
    // Predicated region
    $region38: #{tpu_custom_call.1} parent=1 // pred_check
      _
    $region39: #{tpu_custom_call.1} parent=1 // pred_check_branch
      %1174 = sbr.rel (0) target = $region41
    $region40: #{tpu_custom_call.1} parent=1 // pred_region
      %1175 = dma.done [#allocation4], 128
    $region41: #{tpu_custom_call.1} parent=1 // pred_fallthru
      _
    %1176 = vsyncpa [#allocation3], 1
    %1177 = vsyncpa [#allocation6], 1
    %1178 = vsyncpa [#allocation9], 1
    %1179 = vsyncpa [#allocation4], 1

</llo_original>
